<compile_context>
chip_gen: v6e
topology: v6e:2x2x1
jax: 0.10.0
libtpu: 0.0.40
codegen_flags: <defaults>
</compile_context>

<pallas_src>
import math
import warnings

import jax
import jax.numpy as jnp
import numpy as np
from jax.experimental import pallas as pl
from jax.experimental.pallas import tpu as pltpu


_TARGET_BLOCK_BYTES = 4 * 1024 * 1024   # ~4 MiB/block: big enough to amortize the
                                         # ~0.35us/step overhead, small enough that
                                         # 3 input + 2 output buffers fit the scoped
                                         # VMEM budget below on every generation.
_VMEM_LIMIT_BYTES = 32 * 1024 * 1024     # legal on v5e/v6e/v7x (v7x physical = 64 MiB)
_LANES = 128                             # vreg lane width


def _identity_copy_kernel(x_ref, o_ref):
    # Pure VMEM tile copy (identity).
    o_ref[...] = x_ref[...]


def _pick_lane_cols(n: int):
    """Widest lane-dense last dim (multiple of 128) that divides n exactly."""
    for cols in (1024, 512, 256, _LANES):
        if n % cols == 0:
            return cols
    return None


def _pick_tile_rows(rows: int, cols: int, itemsize: int) -> int:
    """Rows per block: ~_TARGET_BLOCK_BYTES, multiple of 8, >= 2 grid steps."""
    if rows <= 8:
        # Tiny array: one full-extent block (exempt from the (8,128) rule).
        return rows
    max_rows = max(8, (_TARGET_BLOCK_BYTES // (cols * itemsize)) // 8 * 8)
    # Aim for at least two grid steps so the "parallel" axis can be sharded
    # across both TensorCores on v7x.
    half_rows = ((pl.cdiv(rows, 2) + 7) // 8) * 8
    return min(max_rows, half_rows)


def _tiled_copy_2d(x2d: jax.Array) -> jax.Array:
    """Row-tiled, software-pipelined, alias-friendly copy of a 2-D array."""
    rows, cols = x2d.shape
    tile_rows = _pick_tile_rows(rows, cols, x2d.dtype.itemsize)
    num_blocks = pl.cdiv(rows, tile_rows)

    in_spec_kwargs = {}
    if num_blocks >= 3:
        # A copy has no compute to hide DMA latency behind; a third input
        # buffer covers the read-latency bubble at grid-step boundaries.
        in_spec_kwargs["pipeline_mode"] = pl.Buffered(3)

    return pl.pallas_call(
        _identity_copy_kernel,
        out_shape=jax.ShapeDtypeStruct((rows, cols), x2d.dtype),
        grid=(num_blocks,),
        in_specs=[pl.BlockSpec((tile_rows, cols), lambda i: (i, 0),
                               **in_spec_kwargs)],
        out_specs=pl.BlockSpec((tile_rows, cols), lambda i: (i, 0)),
        # Identity: let the output live in the input's HBM buffer. Actually
        # honored when the caller jits + donates (see jitted wrappers below).
        input_output_aliases={0: 0},
        compiler_params=pltpu.CompilerParams(
            dimension_semantics=("parallel",),
            vmem_limit_bytes=_VMEM_LIMIT_BYTES,
        ),
    )(x2d)


def identity_encoder_forward(obs: jax.Array) -> jax.Array:
    """Materialized identity via a lane-dense Pallas TPU copy kernel."""
    shape = obs.shape
    n = math.prod(shape) if shape else 1

    cols = _pick_lane_cols(n)
    if cols is not None:
        # Lane-dense view (rows, cols), cols a multiple of 128. The row-major
        # reshape is layout-compatible -> metadata only, not extra compute.
        rows = n // cols
        out2d = _tiled_copy_2d(obs.reshape(rows, cols))
        return out2d.reshape(shape)

    # Awkward sizes: pad the flat view up to a multiple of 128 lanes so the
    # copy still issues full-width (unmasked) stores, then slice the pad off.
    pad = (-n) % _LANES
    flat = jnp.pad(obs.reshape(n), (0, pad))
    rows = (n + pad) // _LANES
    out = _tiled_copy_2d(flat.reshape(rows, _LANES))
    return out.reshape(rows * _LANES)[:n].reshape(shape)


# Materialized path, jitted. The donating variant lets XLA honor the
# input->output alias (no new HBM buffer); callers must not reuse `obs` after.
_forward_materialized_donating = jax.jit(identity_encoder_forward, donate_argnums=0)
_forward_materialized = jax.jit(identity_encoder_forward)


class IdentityEncoder:
    """Mirror of the PyTorch module's interface."""

    def __init__(self, obs_shape, feature_dim, num_layers, num_filters, *args):
        assert len(obs_shape) == 1
        self.feature_dim = obs_shape[0]

    def forward(self, obs, detach=False, materialize=False, donate=True):
        # `detach` only affects autograd in PyTorch; forward values are identical.
        if not materialize:
            # Highest-value optimization: the identity op should cost nothing.
            return obs
        # Explicit op boundary / materialized copy requested: Pallas kernel.
        if donate:
            return _forward_materialized_donating(obs)
        return _forward_materialized(obs)

    def copy_conv_weights_from(self, source):
        pass


if __name__ == "__main__":
    # Cosmetic only: if XLA ever declines the donated alias it falls back to a
    # defensive copy (still correct); keep the run log free of the advisory.
    warnings.filterwarnings(
        "ignore", message="Some donated buffers were not usable")

    key = jax.random.PRNGKey(0)
    batch, feature_dim = 8, 32  # obs_shape = (32,)
    obs = jax.random.normal(key, (batch, feature_dim), dtype=jnp.float32)
    obs_host = np.asarray(obs)  # host copy: survives donation of `obs` below

    enc = IdentityEncoder(obs_shape=(feature_dim,), feature_dim=50,
                          num_layers=4, num_filters=32)

    # Zero-cost path (exact PyTorch semantics). Checked BEFORE donation.
    out_fast = enc.forward(obs)
    assert out_fast.shape == obs.shape and out_fast.dtype == obs.dtype
    assert bool(jnp.all(out_fast == obs))
    del out_fast

    # Pallas kernel path (materialized copy), jitted + donated. `obs` must not
    # be read after this call -> verify against the saved host copy.
    out_kernel = jax.block_until_ready(enc.forward(obs, materialize=True))
    assert out_kernel.shape == tuple(obs_host.shape)
    assert out_kernel.dtype == obs_host.dtype
    assert np.array_equal(np.asarray(out_kernel), obs_host)
    print("KERNEL_OK")
</pallas_src>

<mosaic_0001>
module attributes {stable_mosaic.version = 11 : i64} {
  func.func @_identity_copy_kernel(%arg0: i32, %arg1: memref<1x256xf32, #tpu.memory_space<vmem>>, %arg2: memref<1x256xf32, #tpu.memory_space<vmem>>) attributes {dimension_semantics = [#tpu.dimension_semantics<parallel>], iteration_bounds = array<i64: 1>, scalar_prefetch = 0 : i64, scratch_operands = 0 : i64, tpu.core_type = #tpu.core_type<tc>, window_params = [{transform_indices = @transform_0, window_bounds = array<i64: 1, 256>}, {transform_indices = @transform_1, window_bounds = array<i64: 1, 256>}]} {
    %c0 = arith.constant 0 : index
    %c0_0 = arith.constant 0 : index
    %0 = vector.load %arg1[%c0, %c0_0] : memref<1x256xf32, #tpu.memory_space<vmem>>, vector<1x256xf32>
    %c0_1 = arith.constant 0 : index
    %c0_2 = arith.constant 0 : index
    %1 = vector.load %arg2[%c0_1, %c0_2] : memref<1x256xf32, #tpu.memory_space<vmem>>, vector<1x256xf32>
    tpu.vector_store %arg2[%c0_1, %c0_2], %0 {strides = array<i32>} : memref<1x256xf32, #tpu.memory_space<vmem>>, vector<1x256xf32>,
    return
  }
  func.func @transform_0(%arg0: i32) -> (i32, i32) {
    %c0_i32 = arith.constant 0 : i32
    %c0_i32_0 = arith.constant 0 : i32
    return %arg0, %c0_i32 : i32, i32
  }
  func.func @transform_1(%arg0: i32) -> (i32, i32) {
    %c0_i32 = arith.constant 0 : i32
    %c0_i32_0 = arith.constant 0 : i32
    return %arg0, %c0_i32 : i32, i32
  }
}

</mosaic_0001>

<llo_original>
// kernel: identity_encoder_forward.1
$region0: #{identity_encoder_forward.1}
  #allocation0 [shape = 'u32[]', space=smem, size = 0x4, offset = 0x4, fixed_abs, tag = 'smem constant byte address 0x4 - core index']
  #allocation1 [shape = 'u32[144,128]{1,0:T(1,128)}', space=vmem, size = 0x12000, scoped, tag = 'internal scratch']
  %s0 = inlined_call_operand.vmem [shape: f32[1,256], index: 0, kind: input, shape index: {}, may-alias: {0,1}]
  %s1 = inlined_call_operand.vmem [shape: f32[1,256], index: 1, kind: output, shape index: {}, may-alias: {0,1}]
  %s2 = sld [smem:[#allocation0]]
  $region14: #{identity_encoder_forward.1} parent=0
    _
  %s4 = ssub.s32 1, %s2
  %s5 = scalar_select 0, %s4, %s2
  // Predicated region
  $region2: #{identity_encoder_forward.1} parent=0 // pred_check
    _
  $region3: #{identity_encoder_forward.1} parent=0 // pred_check_branch
    %7 = sbr.rel (0) target = $region5
  $region4: #{identity_encoder_forward.1} parent=0 // pred_region
    _
  $region5: #{identity_encoder_forward.1} parent=0 // pred_fallthru
    _
  %v8 = vld [vmem:[%s0] sm:$0x3]
  %v9 = vlaneseq
  %vm10 = vcmp.ge.s32.totalorder %v9, 0
  %vm11 = vcmp.lt.s32.totalorder %v9, 256
  %vm12 = vmand %vm10, %vm11
  %13 = vst.msk [vmem:[%s1] sm:$0x3] %vm12, %v8
  // Predicated region
  $region6: #{identity_encoder_forward.1} parent=0 // pred_check
    _
  $region7: #{identity_encoder_forward.1} parent=0 // pred_check_branch
    %15 = sbr.rel (0) target = $region9
  $region8: #{identity_encoder_forward.1} parent=0 // pred_region
    _
  $region9: #{identity_encoder_forward.1} parent=0 // pred_fallthru
    _
  // Predicated region
  $region10: #{identity_encoder_forward.1} parent=0 // pred_check
    _
  $region11: #{identity_encoder_forward.1} parent=0 // pred_check_branch
    %17 = sbr.rel (0) target = $region13
  $region12: #{identity_encoder_forward.1} parent=0 // pred_region
    _
  $region13: #{identity_encoder_forward.1} parent=0 // pred_fallthru
    _

</llo_original>
